<compile_context>
chip_gen: v7x
topology: tpu7x:2x2x1
jax: 0.10.0
libtpu: 0.0.40
codegen_flags: <defaults>
</compile_context>

<pallas_src>
from functools import partial

import numpy as np
import jax
import jax.numpy as jnp
from jax import lax
from jax.experimental import pallas as pl
from jax.experimental.pallas import tpu as pltpu


def _upsample_kernel(x_ref, b_ref, o_ref, *, img_h):
    """Fused 3x3 conv (pad=1, no bias) + PixelShuffle(2); one GEMM for the whole batch.

    x_ref: (N*H, W*Cin)       bf16  lane-dense input rows, all images stacked along M
    b_ref: (3*W*Cin, W*Cout)  bf16  banded conv + shuffle matrix (kh folded into K)
    o_ref: (N*H, W*Cout)            row b*H + h holds shuffled output rows 2h, 2h+1 of image b
    """
    x = x_ref[...]                                               # (M, K), M = N*H, K = W*Cin
    m, k = x.shape
    zrow = jnp.zeros((1, k), x.dtype)
    # +-1 row shifts realise the kh = 0 / kh = 2 taps (zero padding along H).  Images share
    # the M axis, so rows at image boundaries are masked: image b never reads rows of b+-1.
    x_prev = jnp.concatenate([zrow, x[:-1, :]], axis=0)          # row r-1
    x_next = jnp.concatenate([x[1:, :], zrow], axis=0)           # row r+1
    row = lax.broadcasted_iota(jnp.int32, (m, k), 0)
    x_prev = jnp.where(row % img_h == 0, jnp.zeros_like(x_prev), x_prev)
    x_next = jnp.where(row % img_h == img_h - 1, jnp.zeros_like(x_next), x_next)
    # Fold the kh tap into the contraction: one MXU GEMM with K = 3*W*Cin.
    x3 = jnp.concatenate([x_prev, x, x_next], axis=-1)           # (M, 3K)
    acc = jnp.dot(x3, b_ref[...], preferred_element_type=jnp.float32)
    o_ref[...] = acc.astype(o_ref.dtype)                         # unmasked 128-lane stores


def _build_banded_weight(w_oihw, width):
    """Fold Conv2d(k=3, pad=1 along W) + PixelShuffle(2) into one (3*W*Cin, W*Cout) matrix.

    Row index  kh*(W*Cin) + w_in*Cin + ci  matches the [x[h-1] | x[h] | x[h+1]] lane
    concatenation built in the kernel; column index ((i*W + w)*2 + j)*Cfin + c is exactly
    the pixel-shuffled NHWC lane order, so the kernel output needs no permutation.  The kw
    taps and the implicit zero padding along W are encoded by shifted identity matrices.
    """
    cout, cin, kh, kw = w_oihw.shape
    if (kh, kw) != (3, 3):
        raise ValueError(f"expected a 3x3 convolution kernel, got {(kh, kw)}")
    if cout % 4 != 0:
        raise ValueError(
            f"Conv2d out_channels (= 2*n_feat) must be divisible by 4 for PixelShuffle(2); got {cout}")
    c_fin = cout // 4
    # PixelShuffle(2): conv channel co = 4*c + 2*i + j -> final channel c at offset (i, j).
    w_cij = w_oihw.reshape(c_fin, 2, 2, cin, 3, 3)                  # [c, i, j, ci, kh, kw]
    # Shifted identities encode the kw tap and the implicit zero padding along W.
    shift = np.stack([np.eye(width, k=1 - dw) for dw in range(3)])  # [kw, w_in, w_out]
    shift = jnp.asarray(shift, dtype=w_oihw.dtype)
    # B6[kh, w_in, ci, i, w_out, j, c] = w[4c+2i+j, ci, kh, kw] * [w_in == w_out + kw - 1]
    b6 = jnp.einsum("dnm,cijkhd->hnkimjc", shift, w_cij,
                    precision=lax.Precision.HIGHEST)
    return b6.reshape(3 * width * cin, width * cout)


@partial(jax.jit, static_argnames=("out_dtype",))
def upsample_forward(x_nchw, w_oihw, *, out_dtype=jnp.float32):
    """Equivalent of Upsample(n_feat).forward(x): NCHW in -> NCHW out."""
    n, cin, hgt, wid = x_nchw.shape
    cout = w_oihw.shape[0]
    c_fin = cout // 4

    # NCHW -> lane-dense (N*H, W*Cin) rows (all images stacked along the GEMM M axis),
    # bf16 MXU operands.
    # TODO(synk): at production sizes keep the surrounding model NHWC (or fuse this relayout
    # into the producing op) -- each interface transpose is a full HBM round trip.
    x_rows = jnp.transpose(x_nchw, (0, 2, 3, 1)).reshape(n * hgt, wid * cin)
    x_rows = x_rows.astype(jnp.bfloat16)
    b = _build_banded_weight(w_oihw, wid).astype(jnp.bfloat16)

    out = pl.pallas_call(
        partial(_upsample_kernel, img_h=hgt),
        out_shape=jax.ShapeDtypeStruct((n * hgt, wid * cout), out_dtype),
        grid=(1,),  # one step: batch + kh taps folded into a single GEMM, no per-step overhead
        in_specs=[
            pl.BlockSpec((n * hgt, wid * cin), lambda i: (0, 0)),
            pl.BlockSpec((3 * wid * cin, wid * cout), lambda i: (0, 0)),
        ],
        out_specs=pl.BlockSpec((n * hgt, wid * cout), lambda i: (0, 0)),
        compiler_params=pltpu.CompilerParams(dimension_semantics=("arbitrary",)),
    )(x_rows, b)

    # Kernel row b*H + h already holds shuffled output rows (2h, 2h+1) of image b in lane
    # order ((i*W + w)*2 + j)*Cfin + c -> pure (free) reshape to NHWC, then the single
    # NHWC->NCHW transpose mandated by the PyTorch interface.
    z_nhwc = out.reshape(n, 2 * hgt, 2 * wid, c_fin)
    return jnp.transpose(z_nhwc, (0, 3, 1, 2))


def upsample_reference(x_nchw, w_oihw):
    """Plain-JAX reference (lax conv + PixelShuffle) for correctness checking."""
    y = lax.conv_general_dilated(
        x_nchw, w_oihw, window_strides=(1, 1), padding=((1, 1), (1, 1)),
        dimension_numbers=("NCHW", "OIHW", "NCHW"),
        precision=lax.Precision.HIGHEST)
    n, c, h, w = y.shape
    z = y.reshape(n, c // 4, 2, 2, h, w)
    z = jnp.transpose(z, (0, 1, 4, 2, 5, 3))
    return z.reshape(n, c // 4, 2 * h, 2 * w)


if __name__ == "__main__":
    batch, n_feat, H, W = 2, 4, 16, 16

    key = jax.random.PRNGKey(0)
    kx, kw = jax.random.split(key)
    x = jax.random.normal(kx, (batch, n_feat, H, W), dtype=jnp.float32)
    # Conv2d(n_feat, 2*n_feat, 3, bias=False) weight, OIHW, deterministic init.
    w = jax.random.normal(kw, (2 * n_feat, n_feat, 3, 3), dtype=jnp.float32) * 0.1

    out = jax.block_until_ready(upsample_forward(x, w))

    # The kernel feeds the MXU bf16 operands with f32 accumulation, so compare against the
    # reference evaluated on the same bf16-rounded operands (bf16*bf16 products are exact
    # in f32, so only accumulation order differs and the check stays tight).
    x_q = x.astype(jnp.bfloat16).astype(jnp.float32)
    w_q = w.astype(jnp.bfloat16).astype(jnp.float32)
    ref = jax.block_until_ready(upsample_reference(x_q, w_q))

    assert out.shape == (batch, n_feat // 2, 2 * H, 2 * W), out.shape
    assert out.dtype == jnp.float32
    assert jnp.allclose(out, ref, atol=1e-3, rtol=1e-3), float(jnp.max(jnp.abs(out - ref)))

    print("KERNEL_OK")
</pallas_src>

<mosaic_0001>
module attributes {stable_mosaic.version = 11 : i64} {
  func.func @_upsample_kernel(%arg0: i32, %arg1: memref<32x64xbf16, #tpu.memory_space<vmem>>, %arg2: memref<192x128xbf16, #tpu.memory_space<vmem>>, %arg3: memref<32x128xf32, #tpu.memory_space<vmem>>) attributes {dimension_semantics = [#tpu.dimension_semantics<arbitrary>], iteration_bounds = array<i64: 1>, scalar_prefetch = 0 : i64, scratch_operands = 0 : i64, tpu.core_type = #tpu.core_type<tc>, window_params = [{pipeline_mode = #tpu.pipeline_mode<synchronous>, transform_indices = @transform_0, window_bounds = array<i64: 32, 64>}, {pipeline_mode = #tpu.pipeline_mode<synchronous>, transform_indices = @transform_1, window_bounds = array<i64: 192, 128>}, {pipeline_mode = #tpu.pipeline_mode<synchronous>, transform_indices = @transform_2, window_bounds = array<i64: 32, 128>}]} {
    %c0 = arith.constant 0 : index
    %c0_0 = arith.constant 0 : index
    %0 = vector.load %arg1[%c0, %c0_0] : memref<32x64xbf16, #tpu.memory_space<vmem>>, vector<32x64xbf16>
    %cst = arith.constant 0.000000e+00 : bf16
    %1 = vector.broadcast %cst : bf16 to vector<1x64xbf16>
    %2 = vector.extract_strided_slice %0 {offsets = [0, 0], sizes = [31, 64], strides = [1, 1]} : vector<32x64xbf16> to vector<31x64xbf16>
    %3 = tpu.concatenate %1, %2 in 0 : vector<1x64xbf16>, vector<31x64xbf16> -> vector<32x64xbf16>
    %4 = vector.extract_strided_slice %0 {offsets = [1, 0], sizes = [31, 64], strides = [1, 1]} : vector<32x64xbf16> to vector<31x64xbf16>
    %5 = tpu.concatenate %4, %1 in 0 : vector<31x64xbf16>, vector<1x64xbf16> -> vector<32x64xbf16>
    %6 = tpu.iota {dimensions = array<i32: 0>} : vector<32x64xi32>
    %c16_i32 = arith.constant 16 : i32
    %c0_i32 = arith.constant 0 : i32
    %7 = arith.cmpi eq, %c16_i32, %c0_i32 : i32
    %c1_i32 = arith.constant 1 : i32
    %8 = arith.select %7, %c1_i32, %c16_i32 : i32
    %9 = vector.broadcast %8 : i32 to vector<32x64xi32>
    %10 = arith.remsi %6, %9 : vector<32x64xi32>
    %c0_i32_1 = arith.constant 0 : i32
    %11 = vector.broadcast %c0_i32_1 : i32 to vector<32x64xi32>
    %12 = arith.cmpi ne, %10, %11 : vector<32x64xi32>
    %c0_i32_2 = arith.constant 0 : i32
    %13 = vector.broadcast %c0_i32_2 : i32 to vector<32x64xi32>
    %14 = arith.cmpi slt, %10, %13 : vector<32x64xi32>
    %c0_i32_3 = arith.constant 0 : i32
    %15 = arith.cmpi slt, %8, %c0_i32_3 : i32
    %16 = vector.broadcast %15 : i1 to vector<32x64xi1>
    %17 = vector.broadcast %16 : vector<32x64xi1> to vector<32x64xi1>
    %18 = arith.xori %14, %17 : vector<32x64xi1>
    %19 = arith.andi %18, %12 : vector<32x64xi1>
    %20 = vector.broadcast %8 : i32 to vector<32x64xi32>
    %21 = arith.addi %10, %20 : vector<32x64xi32>
    %22 = arith.select %19, %21, %10 : vector<32x64xi1>, vector<32x64xi32>
    %c0_i32_4 = arith.constant 0 : i32
    %23 = vector.broadcast %c0_i32_4 : i32 to vector<32x64xi32>
    %24 = arith.cmpi eq, %22, %23 : vector<32x64xi32>
    %cst_5 = arith.constant 0.000000e+00 : bf16
    %25 = vector.broadcast %cst_5 : bf16 to vector<32x64xbf16>
    %26 = arith.select %24, %25, %3 : vector<32x64xi1>, vector<32x64xbf16>
    %c16_i32_6 = arith.constant 16 : i32
    %c0_i32_7 = arith.constant 0 : i32
    %27 = arith.cmpi eq, %c16_i32_6, %c0_i32_7 : i32
    %c1_i32_8 = arith.constant 1 : i32
    %28 = arith.select %27, %c1_i32_8, %c16_i32_6 : i32
    %29 = vector.broadcast %28 : i32 to vector<32x64xi32>
    %30 = arith.remsi %6, %29 : vector<32x64xi32>
    %c0_i32_9 = arith.constant 0 : i32
    %31 = vector.broadcast %c0_i32_9 : i32 to vector<32x64xi32>
    %32 = arith.cmpi ne, %30, %31 : vector<32x64xi32>
    %c0_i32_10 = arith.constant 0 : i32
    %33 = vector.broadcast %c0_i32_10 : i32 to vector<32x64xi32>
    %34 = arith.cmpi slt, %30, %33 : vector<32x64xi32>
    %c0_i32_11 = arith.constant 0 : i32
    %35 = arith.cmpi slt, %28, %c0_i32_11 : i32
    %36 = vector.broadcast %35 : i1 to vector<32x64xi1>
    %37 = vector.broadcast %36 : vector<32x64xi1> to vector<32x64xi1>
    %38 = arith.xori %34, %37 : vector<32x64xi1>
    %39 = arith.andi %38, %32 : vector<32x64xi1>
    %40 = vector.broadcast %28 : i32 to vector<32x64xi32>
    %41 = arith.addi %30, %40 : vector<32x64xi32>
    %42 = arith.select %39, %41, %30 : vector<32x64xi1>, vector<32x64xi32>
    %c15_i32 = arith.constant 15 : i32
    %43 = vector.broadcast %c15_i32 : i32 to vector<32x64xi32>
    %44 = arith.cmpi eq, %42, %43 : vector<32x64xi32>
    %cst_12 = arith.constant 0.000000e+00 : bf16
    %45 = vector.broadcast %cst_12 : bf16 to vector<32x64xbf16>
    %46 = arith.select %44, %45, %5 : vector<32x64xi1>, vector<32x64xbf16>
    %47 = tpu.concatenate %26, %0, %46 in 1 : vector<32x64xbf16>, vector<32x64xbf16>, vector<32x64xbf16> -> vector<32x192xbf16>
    %c0_13 = arith.constant 0 : index
    %c0_14 = arith.constant 0 : index
    %48 = vector.load %arg2[%c0_13, %c0_14] : memref<192x128xbf16, #tpu.memory_space<vmem>>, vector<192x128xbf16>
    %cst_15 = arith.constant dense<0.000000e+00> : vector<32x128xf32>
    %49 = tpu.matmul %47, %48, %cst_15 {dimension_numbers = #tpu.dot_dimension_numbers<[1], [0], [0], [1], [0, 0, 1, 1], [], []>} : vector<32x192xbf16>, vector<192x128xbf16>, vector<32x128xf32> -> vector<32x128xf32>
    %c0_16 = arith.constant 0 : index
    %c0_17 = arith.constant 0 : index
    %50 = vector.load %arg3[%c0_16, %c0_17] : memref<32x128xf32, #tpu.memory_space<vmem>>, vector<32x128xf32>
    tpu.vector_store %arg3[%c0_16, %c0_17], %49 {strides = array<i32>} : memref<32x128xf32, #tpu.memory_space<vmem>>, vector<32x128xf32>,
    return
  }
  func.func @transform_0(%arg0: i32) -> (i32, i32) {
    %c0_i32 = arith.constant 0 : i32
    %c0_i32_0 = arith.constant 0 : i32
    %c0_i32_1 = arith.constant 0 : i32
    return %c0_i32, %c0_i32_0 : i32, i32
  }
  func.func @transform_1(%arg0: i32) -> (i32, i32) {
    %c0_i32 = arith.constant 0 : i32
    %c0_i32_0 = arith.constant 0 : i32
    %c0_i32_1 = arith.constant 0 : i32
    return %c0_i32, %c0_i32_0 : i32, i32
  }
  func.func @transform_2(%arg0: i32) -> (i32, i32) {
    %c0_i32 = arith.constant 0 : i32
    %c0_i32_0 = arith.constant 0 : i32
    %c0_i32_1 = arith.constant 0 : i32
    return %c0_i32, %c0_i32_0 : i32, i32
  }
}

</mosaic_0001>

<llo_original>
// kernel: upsample_forward.1
$region0: #{upsample_forward.1}
  #allocation0 [shape = 'u32[]', space=smem, size = 0x4, offset = 0x4, fixed_abs, tag = 'smem constant byte address 0x4 - core index']
  #allocation1 [shape = 'u32[144,128]{1,0:T(1,128)}', space=vmem, size = 0x12000, scoped, tag = 'internal scratch']
  %s0 = inlined_call_operand.vmem [shape: bf16[32,64], index: 0, kind: input, shape index: {}]
  %s1 = inlined_call_operand.vmem [shape: bf16[192,128], index: 1, kind: input, shape index: {}]
  %s2 = inlined_call_operand.vmem [shape: f32[32,128], index: 2, kind: output, shape index: {}]
  %s3 = sld [smem:[#allocation0]]
  $region18: #{upsample_forward.1} parent=0
    _
  %s5 = ssub.s32 1, %s3
  %s6 = scalar_select 0, %s5, %s3
  // Predicated region
  $region2: #{upsample_forward.1} parent=0 // pred_check
    _
  $region3: #{upsample_forward.1} parent=0 // pred_check_branch
    %8 = sbr.rel (0) target = $region5
  $region4: #{upsample_forward.1} parent=0 // pred_region
    _
  $region5: #{upsample_forward.1} parent=0 // pred_fallthru
    _
  // Predicated region
  $region6: #{upsample_forward.1} parent=0 // pred_check
    _
  $region7: #{upsample_forward.1} parent=0 // pred_check_branch
    %10 = sbr.rel (0) target = $region9
  $region8: #{upsample_forward.1} parent=0 // pred_region
    _
  $region9: #{upsample_forward.1} parent=0 // pred_fallthru
    _
  %v14 = vld [vmem:[%s0] sm:$0xf]
  %v15 = vld [vmem:[%s0 + $0x4] sm:$0xf]
  %v16 = vld [vmem:[%s0 + $0x8] sm:$0xf]
  %v17 = vld [vmem:[%s0 + $0xc] sm:$0xf]
  %v22 = vunpack.c.l.b16 %v14
  %v23 = vunpack.c.l.b16 %v15
  %v24 = vunpack.c.l.b16 %v16
  %v25 = vunpack.c.l.b16 %v17
  %v26 = vpack.c.b16 %v23, %v22
  %v27 = vpack.c.b16 %v25, %v24
  %vm28 = vsmask.f32 256
  %v30 = vshrl.u32 %v26, 16
  %v32 = vrot.slane %v30, 7
  %v33 = vshll.u32 %v26, 16
  %v35 = vor.u32 %v32, %v33
  %v37 = vshrl.u32 %v27, 16
  %v39 = vrot.slane %v37, 7
  %v40 = vshll.u32 %v27, 16
  %v42 = vor.u32 %v39, %v40
  %v43 = vsel %vm28, %v32, %v42
  %vm46 = vcmask 1040384
  %vm47 = vmand %vm46, %vm28
  %v48 = vsel %vm47, 0, %v35
  %vm49 = vsmask.f32 7424
  %v50 = vrot.slane %v33, 1
  %v51 = vor.u32 %v30, %v50
  %v52 = vrot.slane %v40, 1
  %v53 = vsel %vm49, %v51, %v52
  %v54 = vor.u32 %v37, %v52
  %vm57 = vcmask 1047552
  %vm58 = vmand %vm57, %vm49
  %v59 = vsel %vm58, %v54, 0
  %v60 = vlaneseq
  %v61 = vshrl.u32 %v60, 7
  %v62 = vadd.s32 %v61, 8
  %v63 = vadd.s32 %v61, 16
  %v64 = vadd.s32 %v61, 24
  %vm65 = vcmp.lt.s32.totalorder %v61, 0
  %v66 = vsub.s32 0, %v61
  %v67 = vsel %vm65, %v66, %v61
  %v68 = vshrl.u32 %v67, 4
  %v69 = vand.u32 %v67, 15
  %v70 = vsub.s32 0, %v69
  %v71 = vsel %vm65, %v70, %v69
  %vm72 = vcmp.lt.s32.totalorder %v62, 0
  %v73 = vsub.s32 0, %v62
  %v74 = vsel %vm72, %v73, %v62
  %v75 = vshrl.u32 %v74, 4
  %v76 = vand.u32 %v74, 15
  %v77 = vsub.s32 0, %v76
  %v78 = vsel %vm72, %v77, %v76
  %vm79 = vcmp.lt.s32.totalorder %v63, 0
  %v80 = vsub.s32 0, %v63
  %v81 = vsel %vm79, %v80, %v63
  %v82 = vshrl.u32 %v81, 4
  %v83 = vand.u32 %v81, 15
  %v84 = vsub.s32 0, %v83
  %v85 = vsel %vm79, %v84, %v83
  %vm86 = vcmp.lt.s32.totalorder %v64, 0
  %v87 = vsub.s32 0, %v64
  %v88 = vsel %vm86, %v87, %v64
  %v89 = vshrl.u32 %v88, 4
  %v90 = vand.u32 %v88, 15
  %v91 = vsub.s32 0, %v90
  %v92 = vsel %vm86, %v91, %v90
  %vm93 = vcmp.ne.s32.totalorder %v71, 0
  %vm94 = vcmp.ne.s32.totalorder %v78, 0
  %vm95 = vcmp.ne.s32.totalorder %v85, 0
  %vm96 = vcmp.ne.s32.totalorder %v92, 0
  %vm97 = vcmp.lt.s32.totalorder %v71, 0
  %vm98 = vcmp.lt.s32.totalorder %v78, 0
  %vm99 = vcmp.lt.s32.totalorder %v85, 0
  %vm100 = vcmp.lt.s32.totalorder %v92, 0
  %vm101 = vmand %vm97, %vm93
  %vm102 = vmand %vm98, %vm94
  %vm103 = vmand %vm99, %vm95
  %vm104 = vmand %vm100, %vm96
  %v105 = vadd.s32 %v71, 16
  %v106 = vadd.s32 %v78, 16
  %v107 = vadd.s32 %v85, 16
  %v108 = vadd.s32 %v92, 16
  %v109 = vsel %vm101, %v105, %v71
  %v110 = vsel %vm102, %v106, %v78
  %v111 = vsel %vm103, %v107, %v85
  %v112 = vsel %vm104, %v108, %v92
  %vm113 = vcmp.eq.s32.totalorder %v109, 0
  %vm114 = vcmp.eq.s32.totalorder %v110, 0
  %vm115 = vcmp.eq.s32.totalorder %v111, 0
  %vm116 = vcmp.eq.s32.totalorder %v112, 0
  %vm117 = vmpackc.low %vm113, %vm113
  %vm118 = vmpackc.low %vm114, %vm114
  %vm119 = vmpackc.low %vm115, %vm115
  %vm120 = vmpackc.low %vm116, %vm116
  %v121 = vsel %vm117, 65537, 0
  %v122 = vsel %vm118, 65537, 0
  %v123 = vsel %vm119, 65537, 0
  %v124 = vsel %vm120, 65537, 0
  %v125 = vunpack.c.l.b16 %v121
  %v126 = vunpack.c.l.b16 %v122
  %v127 = vunpack.c.l.b16 %v123
  %v128 = vunpack.c.l.b16 %v124
  %v129 = vpack.c.b16 %v126, %v125
  %v130 = vpack.c.b16 %v128, %v127
  %vm131 = vcmp.ne.s16.totalorder %v129, 0
  %vm132 = vcmp.ne.s16.totalorder %v130, 0
  %v133 = vsel %vm131, 0, %v48
  %v134 = vsel %vm132, 0, %v43
  %vm135 = vcmp.eq.s32.totalorder %v109, 15
  %vm136 = vcmp.eq.s32.totalorder %v110, 15
  %vm137 = vcmp.eq.s32.totalorder %v111, 15
  %vm138 = vcmp.eq.s32.totalorder %v112, 15
  %vm139 = vmpackc.low %vm135, %vm135
  %vm140 = vmpackc.low %vm136, %vm136
  %vm141 = vmpackc.low %vm137, %vm137
  %vm142 = vmpackc.low %vm138, %vm138
  %v143 = vsel %vm139, 65537, 0
  %v144 = vsel %vm140, 65537, 0
  %v145 = vsel %vm141, 65537, 0
  %v146 = vsel %vm142, 65537, 0
  %v147 = vunpack.c.l.b16 %v143
  %v148 = vunpack.c.l.b16 %v144
  %v149 = vunpack.c.l.b16 %v145
  %v150 = vunpack.c.l.b16 %v146
  %v151 = vpack.c.b16 %v148, %v147
  %v152 = vpack.c.b16 %v150, %v149
  %vm153 = vcmp.ne.s16.totalorder %v151, 0
  %vm154 = vcmp.ne.s16.totalorder %v152, 0
  %v155 = vsel %vm153, 0, %v53
  %v156 = vsel %vm154, 0, %v59
  %157 = vrot.lane.b32.xlu0 %v26, 64
  %v158 = vpop.permute.xlu0 %157
  %159 = vrot.lane.b32.xlu0 %v27, 64
  %v160 = vpop.permute.xlu0 %159
  %vm161 = vcmask 523264
  %v164 = vsel %vm161, %v133, %v158
  %v168 = vsel %vm161, %v134, %v160
  %v170 = vld [vmem:[%s1] sm:$0xf]
  %v171 = vld [vmem:[%s1 + $0x4] sm:$0xf]
  %v172 = vld [vmem:[%s1 + $0x8] sm:$0xf]
  %v173 = vld [vmem:[%s1 + $0xc] sm:$0xf]
  %v174 = vld [vmem:[%s1 + $0x10] sm:$0xf]
  %v175 = vld [vmem:[%s1 + $0x14] sm:$0xf]
  %v176 = vld [vmem:[%s1 + $0x18] sm:$0xf]
  %v177 = vld [vmem:[%s1 + $0x1c] sm:$0xf]
  %v178 = vld [vmem:[%s1 + $0x20] sm:$0xf]
  %v179 = vld [vmem:[%s1 + $0x24] sm:$0xf]
  %v180 = vld [vmem:[%s1 + $0x28] sm:$0xf]
  %v181 = vld [vmem:[%s1 + $0x2c] sm:$0xf]
  %v182 = vld [vmem:[%s1 + $0x30] sm:$0xf]
  %v183 = vld [vmem:[%s1 + $0x34] sm:$0xf]
  %v184 = vld [vmem:[%s1 + $0x38] sm:$0xf]
  %v185 = vld [vmem:[%s1 + $0x3c] sm:$0xf]
  %v186 = vld [vmem:[%s1 + $0x40] sm:$0xf]
  %v187 = vld [vmem:[%s1 + $0x44] sm:$0xf]
  %v188 = vld [vmem:[%s1 + $0x48] sm:$0xf]
  %v189 = vld [vmem:[%s1 + $0x4c] sm:$0xf]
  %v190 = vld [vmem:[%s1 + $0x50] sm:$0xf]
  %v191 = vld [vmem:[%s1 + $0x54] sm:$0xf]
  %v192 = vld [vmem:[%s1 + $0x58] sm:$0xf]
  %v193 = vld [vmem:[%s1 + $0x5c] sm:$0xf]
  %v218 = vunpack.c.l.b16 %v170
  %v219 = vunpack.c.l.b16 %v171
  %v220 = vunpack.c.l.b16 %v172
  %v221 = vunpack.c.l.b16 %v173
  %v222 = vunpack.c.l.b16 %v174
  %v223 = vunpack.c.l.b16 %v175
  %v224 = vunpack.c.l.b16 %v176
  %v225 = vunpack.c.l.b16 %v177
  %v226 = vunpack.c.l.b16 %v178
  %v227 = vunpack.c.l.b16 %v179
  %v228 = vunpack.c.l.b16 %v180
  %v229 = vunpack.c.l.b16 %v181
  %v230 = vunpack.c.l.b16 %v182
  %v231 = vunpack.c.l.b16 %v183
  %v232 = vunpack.c.l.b16 %v184
  %v233 = vunpack.c.l.b16 %v185
  %v234 = vunpack.c.l.b16 %v186
  %v235 = vunpack.c.l.b16 %v187
  %v236 = vunpack.c.l.b16 %v188
  %v237 = vunpack.c.l.b16 %v189
  %v238 = vunpack.c.l.b16 %v190
  %v239 = vunpack.c.l.b16 %v191
  %v240 = vunpack.c.l.b16 %v192
  %v241 = vunpack.c.l.b16 %v193
  %v242 = vpack.c.b16 %v219, %v218
  %v243 = vpack.c.b16 %v221, %v220
  %v244 = vpack.c.b16 %v223, %v222
  %v245 = vpack.c.b16 %v225, %v224
  %v246 = vpack.c.b16 %v227, %v226
  %v247 = vpack.c.b16 %v229, %v228
  %v248 = vpack.c.b16 %v231, %v230
  %v249 = vpack.c.b16 %v233, %v232
  %v250 = vpack.c.b16 %v235, %v234
  %v251 = vpack.c.b16 %v237, %v236
  %v252 = vpack.c.b16 %v239, %v238
  %v253 = vpack.c.b16 %v241, %v240
  %v267 = vsel %vm161, %v155, 0
  %v270 = vsel %vm161, %v156, 0
  %272 = vmatprep.subr.bf16.mxu0 0
  %273 = vmatpush1.bf16.msra.mxu0 %v242
  %274 = vmatprep.subr.bf16.mxu0 0
  %275 = vmatpush1.bf16.msra.mxu0 %v243
  %276 = vmatprep.subr.bf16.mxu0 0
  %277 = vmatpush1.bf16.msra.mxu0 %v244
  %278 = vmatprep.subr.bf16.mxu0 0
  %279 = vmatpush1.bf16.msra.mxu0 %v245
  %280 = vmatprep.subr.bf16.mxu0 0
  %281 = vmatpush1.bf16.msra.mxu0 %v246
  %282 = vmatprep.subr.bf16.mxu0 0
  %283 = vmatpush1.bf16.msra.mxu0 %v247
  %284 = vmatprep.subr.bf16.mxu0 0
  %285 = vmatpush1.bf16.msra.mxu0 %v248
  %286 = vmatprep.subr.bf16.mxu0 0
  %287 = vmatpush1.bf16.msra.mxu0 %v249
  %288 = vmatprep.subr.bf16.mxu0 0
  %289 = vmatpush1.bf16.msra.mxu0 %v250
  %290 = vmatprep.subr.bf16.mxu0 0
  %291 = vmatpush1.bf16.msra.mxu0 %v251
  %292 = vmatprep.subr.bf16.mxu0 0
  %293 = vmatpush1.bf16.msra.mxu0 %v252
  %294 = vmatprep.subr.bf16.mxu0 0
  %295 = vmatpush1.bf16.msra.mxu0 %v253
  %296 = vmatprep.subr.bf16.mxu0 0
  %297 = vmatpush1.bf16.msra.mxu0 0
  %298 = vmatprep.subr.bf16.mxu0 0
  %299 = vmatpush1.bf16.msra.mxu0 0
  %300 = vmatprep.subr.bf16.mxu0 0
  %301 = vmatpush1.bf16.msra.mxu0 0
  %302 = vmatprep.subr.bf16.mxu0 0
  %303 = vmatpush1.bf16.msra.mxu0 0
  %304 = vmatprep.mubr.bf16.mxu0 %v267
  %305 = vmatmul.mubr.bf16.gmra.mrb[0].mxu0 %v164
  %v306 = vpop.f32.mrb[0].mxu0
  %v307 = vadd.f32 0.0, %v306
  %v308 = vpop.f32.mrb[0].mxu0
  %v309 = vpop.f32.mrb[0].mxu0
  %v310 = vadd.f32 0.0, %v309
  %v311 = vpop.f32.mrb[0].mxu0
  %312 = vmatprep.mubr.bf16.mxu0 %v270
  %313 = vmatmul.mubr.bf16.gmra.mrb[0].mxu0 %v168
  %v314 = vpop.f32.mrb[0].mxu0
  %v315 = vadd.f32 0.0, %v314
  %v316 = vpop.f32.mrb[0].mxu0
  %v317 = vpop.f32.mrb[0].mxu0
  %v318 = vadd.f32 0.0, %v317
  %v319 = vpop.f32.mrb[0].mxu0
  %320 = vdwg.mxu0
  %321 = vst [vmem:[%s2] sm:$0xff] %v307
  %322 = vst [vmem:[%s2 + $0x8] sm:$0xff] %v310
  %323 = vst [vmem:[%s2 + $0x10] sm:$0xff] %v315
  %324 = vst [vmem:[%s2 + $0x18] sm:$0xff] %v318
  // Predicated region
  $region10: #{upsample_forward.1} parent=0 // pred_check
    _
  $region11: #{upsample_forward.1} parent=0 // pred_check_branch
    %326 = sbr.rel (0) target = $region13
  $region12: #{upsample_forward.1} parent=0 // pred_region
    _
  $region13: #{upsample_forward.1} parent=0 // pred_fallthru
    _
  // Predicated region
  $region14: #{upsample_forward.1} parent=0 // pred_check
    _
  $region15: #{upsample_forward.1} parent=0 // pred_check_branch
    %328 = sbr.rel (0) target = $region17
  $region16: #{upsample_forward.1} parent=0 // pred_region
    _
  $region17: #{upsample_forward.1} parent=0 // pred_fallthru
    _

</llo_original>
